<compile_context>
chip_gen: v7x
topology: tpu7x:2x2x1
jax: 0.10.0
libtpu: 0.0.40
codegen_flags: <defaults>
</compile_context>

<pallas_src>
import functools

import numpy as np

import jax
import jax.numpy as jnp
from jax.experimental import pallas as pl
from jax.experimental.pallas import tpu as pltpu

BN_EPS = 1e-5


def _round_up(x, m):
    return (x + m - 1) // m * m


def _ceil_div(a, b):
    return -(-a // b)


# ----------------------------------------------------------------------------
# Fused kernel: ConvT(s1,K1) + bias + CELU + BN + ConvT(1,K2) + bias
# Layout: channels on sublanes, M = N*W (per-batch blocks of W columns) on
# lanes.  Layer-1 output position t1 = m*s1 + p lives in column m of phase p.
# ----------------------------------------------------------------------------
def _fused_stack_kernel(x_ref, w1t_ref, b1_ref, g1_ref, be1_ref, w2t_ref,
                        b2_ref, valid_ref, o_ref, *,
                        s1, k1, k2, c1p, c2p, bn_count, eps):
    f32 = jnp.float32
    mp = x_ref.shape[-1]

    # ---- shift-right-by-d along lanes via a tiny MXU matmul -----------------
    # shifted[:, j] = a[:, j-d]; zero-fill at the global left edge; per-batch
    # boundaries rely on structural zero columns guaranteed by the wrapper.
    shifts_needed = set()
    for p in range(s1):
        for d in range(1, (k1 - 1 - p) // s1 + 1):
            shifts_needed.add(d)
    for q in range(s1):
        for kk in range(k2):
            e = -((q - kk) // s1)
            if e > 0:
                shifts_needed.add(e)
    smat = {}
    if shifts_needed:
        row = jax.lax.broadcasted_iota(jnp.int32, (mp, mp), 0)
        col = jax.lax.broadcasted_iota(jnp.int32, (mp, mp), 1)
        for d in sorted(shifts_needed):
            smat[d] = jnp.where(col - row == d, 1.0, 0.0).astype(f32)

    def shift_right(a, d):
        if d == 0:
            return a
        return jnp.dot(a, smat[d], preferred_element_type=f32)

    # ---- layer 1: all K1 tap-GEMMs in one MXU call (transposed orientation) -
    a_all = jnp.dot(w1t_ref[...], x_ref[...],
                    preferred_element_type=f32)           # (K1*C1p, Mp)
    b1 = b1_ref[...]                                      # (C1p, 1)

    acts = []
    ssum = jnp.zeros((c1p, 1), f32)
    ssq = jnp.zeros((c1p, 1), f32)
    for p in range(s1):                                   # polyphase assembly
        y = jnp.zeros((c1p, mp), f32)
        for d in range((k1 - 1 - p) // s1 + 1):
            k = p + d * s1
            y = y + shift_right(a_all[k * c1p:(k + 1) * c1p, :], d)
        y = y + b1
        # CELU(alpha=1).  TODO(synk): use jnp.expm1 once confirmed in Mosaic.
        a = jnp.maximum(y, 0.0) + (jnp.exp(jnp.minimum(y, 0.0)) - 1.0)
        v = valid_ref[p]                                  # (1, Mp) validity
        av = a * v
        ssum = ssum + jnp.sum(av, axis=1, keepdims=True)
        ssq = ssq + jnp.sum(av * av, axis=1, keepdims=True)
        acts.append((a, v))

    # ---- fused BatchNorm1d (training-mode batch stats, biased variance) -----
    inv_n = 1.0 / bn_count
    mean = ssum * inv_n
    var = ssq * inv_n - mean * mean
    scale = g1_ref[...] * jax.lax.rsqrt(var + eps)
    shift = be1_ref[...] - mean * scale
    # Re-zero invalid columns so layer-2 shifts pull in exact zeros.
    ybn = [(a * scale + shift) * v for (a, v) in acts]

    # ---- layer 2 (stride 1): per-phase tap-GEMMs + phase-aware shifts -------
    w2t = w2t_ref[...]                                    # (K2*C2p, C1p)
    b2 = b2_ref[...]                                      # (C2p, 1)
    bprod = [jnp.dot(w2t, ybn[r], preferred_element_type=f32)
             for r in range(s1)]                          # each (K2*C2p, Mp)
    for q in range(s1):
        out = jnp.zeros((c2p, mp), f32)
        for kk in range(k2):
            r = (q - kk) % s1
            e = -((q - kk) // s1)
            out = out + shift_right(bprod[r][kk * c2p:(kk + 1) * c2p, :], e)
        o_ref[q] = (out + b2).astype(o_ref.dtype)


# ----------------------------------------------------------------------------
# Wrapper
# ----------------------------------------------------------------------------
def stack_convtran_forward(x, params, strides):
    """x: (N, C_in, L) f32.  params: [(w, b, gamma, beta), ...] per layer,
    w in PyTorch ConvTranspose1d layout (C_in, C_out, K)."""
    # TODO(synk): this fused path covers the module's 2-layer [stride s, 1]
    # configuration; other configs need the per-layer tiled path.
    assert len(params) == 2 and strides[1] == 1

    (w1, b1, g1, be1), (w2, b2, _, _) = params
    n, cin, l = x.shape
    _, c1, k1 = w1.shape
    _, c2, k2 = w2.shape
    s1 = int(strides[0])

    l1 = (l - 1) * s1 + k1                 # layer-1 output length
    l2 = l1 + k2 - 1                       # layer-2 (stride 1) output length
    d_max = (k1 - 1) // s1                 # max layer-1 polyphase shift
    e_max = _ceil_div(k2 - 1, s1)          # max layer-2 shift
    width = l + d_max + e_max              # per-batch column block
    m = n * width
    mp = _round_up(max(m, 128), 128)       # lane-dense, vreg aligned

    cinp = _round_up(cin, 8)
    c1p = _round_up(c1, 8)
    c2p = _round_up(c2, 8)

    # ---- host-side layout prep (tiny; fused by XLA under jit) ---------------
    xt = jnp.transpose(x, (1, 0, 2)).astype(jnp.float32)        # (Cin, N, L)
    xt = jnp.pad(xt, ((0, cinp - cin), (0, 0), (0, width - l)))
    xp = jnp.pad(xt.reshape(cinp, m), ((0, 0), (0, mp - m)))

    w1t = jnp.transpose(w1, (2, 1, 0))                          # (K1, C1, Cin)
    w1t = jnp.pad(w1t, ((0, 0), (0, c1p - c1), (0, cinp - cin)))
    w1t = w1t.reshape(k1 * c1p, cinp).astype(jnp.float32)
    w2t = jnp.transpose(w2, (2, 1, 0))                          # (K2, C2, C1)
    w2t = jnp.pad(w2t, ((0, 0), (0, c2p - c2), (0, c1p - c1)))
    w2t = w2t.reshape(k2 * c2p, c1p).astype(jnp.float32)

    b1c = jnp.pad(b1, (0, c1p - c1)).reshape(c1p, 1)
    g1c = jnp.pad(g1, (0, c1p - c1)).reshape(c1p, 1)
    be1c = jnp.pad(be1, (0, c1p - c1)).reshape(c1p, 1)
    b2c = jnp.pad(b2, (0, c2p - c2)).reshape(c2p, 1)

    # Static per-phase validity masks (real output columns of layer 1).
    valid_np = np.zeros((s1, 1, mp), np.float32)
    for p in range(s1):
        cnt = _ceil_div(l1 - p, s1)
        for nb in range(n):
            valid_np[p, 0, nb * width: nb * width + cnt] = 1.0
    valid = jnp.asarray(valid_np)

    n_shift = sum(1 for p in range(s1)
                  for _ in range(1, (k1 - 1 - p) // s1 + 1)) \
        + sum(1 for q in range(s1) for kk in range(k2) if q < kk)
    cost = pl.CostEstimate(
        flops=2 * mp * (k1 * c1p * cinp + s1 * k2 * c2p * c1p)
        + 2 * n_shift * max(c1p, c2p) * mp * mp,
        transcendentals=s1 * c1p * mp,
        bytes_accessed=4 * (xp.size + w1t.size + w2t.size + valid.size
                            + 3 * c1p + c2p + s1 * c2p * mp),
    )

    kernel = functools.partial(
        _fused_stack_kernel, s1=s1, k1=k1, k2=k2, c1p=c1p, c2p=c2p,
        bn_count=float(n * l1), eps=BN_EPS)

    out = pl.pallas_call(
        kernel,
        out_shape=jax.ShapeDtypeStruct((s1, c2p, mp), jnp.float32),
        in_specs=[pl.BlockSpec(memory_space=pltpu.MemorySpace.VMEM)] * 8,
        out_specs=pl.BlockSpec(memory_space=pltpu.MemorySpace.VMEM),
        cost_estimate=cost,
    )(xp, w1t, b1c, g1c, be1c, w2t, b2c, valid)

    # Phase de-interleave of the final output (channels-first already).
    y = out[:, :c2, :m].reshape(s1, c2, n, width)
    y = jnp.transpose(y, (2, 1, 3, 0)).reshape(n, c2, width * s1)
    return y[:, :, :l2]


# ----------------------------------------------------------------------------
# Pure-JAX reference (independent scatter-add formulation) for a sanity check
# ----------------------------------------------------------------------------
def _ref_convtranspose1d(x, w, b, s):
    n, cin, l = x.shape
    _, cout, k = w.shape
    l_out = (l - 1) * s + k
    y = jnp.zeros((n, cout, l_out), jnp.float32)
    for kk in range(k):
        part = jnp.einsum("ncl,co->nol", x, w[:, :, kk])
        y = y.at[:, :, kk: kk + (l - 1) * s + 1: s].add(part)
    return y + b[None, :, None]


def _ref_forward(x, params, strides):
    n_layers = len(params)
    for i, (w, b, gamma, beta) in enumerate(params):
        x = _ref_convtranspose1d(x, w, b, strides[i])
        if i < n_layers - 1:
            x = jnp.maximum(x, 0.0) + jnp.minimum(
                0.0, jnp.exp(jnp.minimum(x, 0.0)) - 1.0)
            mean = jnp.mean(x, axis=(0, 2), keepdims=True)
            var = jnp.var(x, axis=(0, 2), keepdims=True)
            x = (x - mean) * jax.lax.rsqrt(var + BN_EPS)
            x = x * gamma[None, :, None] + beta[None, :, None]
    return x


# ----------------------------------------------------------------------------
if __name__ == "__main__":
    # module config: stack_convtran(input_channel=4, channels=[8, 6],
    #                               strides=[2, 1], kernel_sizes=[3, 2])
    input_channel = 4
    channels = [8, 6]
    strides = [2, 1]
    kernel_sizes = [3, 2]

    key = jax.random.PRNGKey(0)
    params = []
    cin = input_channel
    for c, k in zip(channels, kernel_sizes):
        key, kw, kb = jax.random.split(key, 3)
        w = jax.random.normal(kw, (cin, c, k), jnp.float32) * 0.2  # (Cin, Cout, K)
        b = jax.random.normal(kb, (c,), jnp.float32) * 0.1
        gamma = jnp.ones((c,), jnp.float32)   # PyTorch BatchNorm1d default init
        beta = jnp.zeros((c,), jnp.float32)
        params.append((w, b, gamma, beta))
        cin = c

    key, kx = jax.random.split(key)
    x = jax.random.normal(kx, (2, input_channel, 16), jnp.float32)  # (N, C, L)

    fwd = jax.jit(functools.partial(stack_convtran_forward, strides=strides))
    out = jax.block_until_ready(fwd(x, params))

    ref = _ref_forward(x, params, strides)
    assert out.shape == ref.shape == (2, channels[-1], 34), out.shape
    err = float(jnp.max(jnp.abs(out - ref)))
    assert jnp.allclose(out, ref, atol=1e-4, rtol=1e-4), err
    print("KERNEL_OK")
</pallas_src>

<mosaic_0001>
module attributes {stable_mosaic.version = 11 : i64} {
  func.func @_fused_stack_kernel(%arg0: memref<8x128xf32, #tpu.memory_space<vmem>>, %arg1: memref<24x8xf32, #tpu.memory_space<vmem>>, %arg2: memref<8x1xf32, #tpu.memory_space<vmem>>, %arg3: memref<8x1xf32, #tpu.memory_space<vmem>>, %arg4: memref<8x1xf32, #tpu.memory_space<vmem>>, %arg5: memref<16x8xf32, #tpu.memory_space<vmem>>, %arg6: memref<8x1xf32, #tpu.memory_space<vmem>>, %arg7: memref<2x1x128xf32, #tpu.memory_space<vmem>>, %arg8: memref<2x8x128xf32, #tpu.memory_space<vmem>>) attributes {dimension_semantics = [], scalar_prefetch = 0 : i64, scratch_operands = 0 : i64, tpu.core_type = #tpu.core_type<tc>} {
    %0 = tpu.iota {dimensions = array<i32: 0>} : vector<128x128xi32>
    %1 = tpu.iota {dimensions = array<i32: 1>} : vector<128x128xi32>
    %2 = arith.subi %1, %0 : vector<128x128xi32>
    %c1_i32 = arith.constant 1 : i32
    %3 = vector.broadcast %c1_i32 : i32 to vector<128x128xi32>
    %4 = arith.cmpi eq, %2, %3 : vector<128x128xi32>
    %cst = arith.constant 1.000000e+00 : f32
    %cst_0 = arith.constant 0.000000e+00 : f32
    %5 = vector.broadcast %cst : f32 to vector<128x128xf32>
    %6 = vector.broadcast %cst_0 : f32 to vector<128x128xf32>
    %7 = arith.select %4, %5, %6 : vector<128x128xi1>, vector<128x128xf32>
    %c0 = arith.constant 0 : index
    %c0_1 = arith.constant 0 : index
    %8 = vector.load %arg1[%c0, %c0_1] : memref<24x8xf32, #tpu.memory_space<vmem>>, vector<24x8xf32>
    %c0_2 = arith.constant 0 : index
    %c0_3 = arith.constant 0 : index
    %9 = vector.load %arg0[%c0_2, %c0_3] : memref<8x128xf32, #tpu.memory_space<vmem>>, vector<8x128xf32>
    %cst_4 = arith.constant dense<0.000000e+00> : vector<24x128xf32>
    %10 = tpu.matmul %8, %9, %cst_4 {dimension_numbers = #tpu.dot_dimension_numbers<[1], [0], [0], [1], [0, 0, 1, 1], [], []>} : vector<24x8xf32>, vector<8x128xf32>, vector<24x128xf32> -> vector<24x128xf32>
    %c0_5 = arith.constant 0 : index
    %c0_6 = arith.constant 0 : index
    %11 = vector.load %arg2[%c0_5, %c0_6] : memref<8x1xf32, #tpu.memory_space<vmem>>, vector<8x1xf32>
    %cst_7 = arith.constant 0.000000e+00 : f32
    %12 = vector.broadcast %cst_7 : f32 to vector<8x1xf32>
    %cst_8 = arith.constant 0.000000e+00 : f32
    %13 = vector.broadcast %cst_8 : f32 to vector<8x1xf32>
    %cst_9 = arith.constant 0.000000e+00 : f32
    %14 = vector.broadcast %cst_9 : f32 to vector<8x128xf32>
    %15 = vector.extract_strided_slice %10 {offsets = [0, 0], sizes = [8, 128], strides = [1, 1]} : vector<24x128xf32> to vector<8x128xf32>
    %16 = arith.addf %14, %15 : vector<8x128xf32>
    %17 = vector.extract_strided_slice %10 {offsets = [16, 0], sizes = [8, 128], strides = [1, 1]} : vector<24x128xf32> to vector<8x128xf32>
    %cst_10 = arith.constant dense<0.000000e+00> : vector<8x128xf32>
    %18 = tpu.matmul %17, %7, %cst_10 {dimension_numbers = #tpu.dot_dimension_numbers<[1], [0], [0], [1], [0, 0, 1, 1], [], []>} : vector<8x128xf32>, vector<128x128xf32>, vector<8x128xf32> -> vector<8x128xf32>
    %19 = arith.addf %16, %18 : vector<8x128xf32>
    %20 = vector.broadcast %11 : vector<8x1xf32> to vector<8x128xf32>
    %21 = arith.addf %19, %20 : vector<8x128xf32>
    %cst_11 = arith.constant 0.000000e+00 : f32
    %22 = vector.broadcast %cst_11 : f32 to vector<8x128xf32>
    %23 = arith.maximumf %21, %22 : vector<8x128xf32>
    %cst_12 = arith.constant 0.000000e+00 : f32
    %24 = vector.broadcast %cst_12 : f32 to vector<8x128xf32>
    %25 = arith.minimumf %21, %24 : vector<8x128xf32>
    %26 = math.exp %25 : vector<8x128xf32>
    %cst_13 = arith.constant 1.000000e+00 : f32
    %27 = vector.broadcast %cst_13 : f32 to vector<8x128xf32>
    %28 = arith.subf %26, %27 : vector<8x128xf32>
    %29 = arith.addf %23, %28 : vector<8x128xf32>
    %c0_14 = arith.constant 0 : index
    %c0_15 = arith.constant 0 : index
    %c0_16 = arith.constant 0 : index
    %30 = vector.load %arg7[%c0_14, %c0_15, %c0_16] : memref<2x1x128xf32, #tpu.memory_space<vmem>>, vector<1x1x128xf32>
    %31 = vector.shape_cast %30 : vector<1x1x128xf32> to vector<1x128xf32>
    %32 = vector.broadcast %31 : vector<1x128xf32> to vector<8x128xf32>
    %33 = arith.mulf %29, %32 : vector<8x128xf32>
    %cst_17 = arith.constant dense<0.000000e+00> : vector<8xf32>
    %34 = vector.multi_reduction <add>, %33, %cst_17 [1] : vector<8x128xf32> to vector<8xf32>
    %35 = vector.shape_cast %34 : vector<8xf32> to vector<8x1xf32>
    %36 = arith.addf %12, %35 : vector<8x1xf32>
    %37 = arith.mulf %33, %33 : vector<8x128xf32>
    %cst_18 = arith.constant dense<0.000000e+00> : vector<8xf32>
    %38 = vector.multi_reduction <add>, %37, %cst_18 [1] : vector<8x128xf32> to vector<8xf32>
    %39 = vector.shape_cast %38 : vector<8xf32> to vector<8x1xf32>
    %40 = arith.addf %13, %39 : vector<8x1xf32>
    %cst_19 = arith.constant 0.000000e+00 : f32
    %41 = vector.broadcast %cst_19 : f32 to vector<8x128xf32>
    %42 = vector.extract_strided_slice %10 {offsets = [8, 0], sizes = [8, 128], strides = [1, 1]} : vector<24x128xf32> to vector<8x128xf32>
    %43 = arith.addf %41, %42 : vector<8x128xf32>
    %44 = vector.broadcast %11 : vector<8x1xf32> to vector<8x128xf32>
    %45 = arith.addf %43, %44 : vector<8x128xf32>
    %cst_20 = arith.constant 0.000000e+00 : f32
    %46 = vector.broadcast %cst_20 : f32 to vector<8x128xf32>
    %47 = arith.maximumf %45, %46 : vector<8x128xf32>
    %cst_21 = arith.constant 0.000000e+00 : f32
    %48 = vector.broadcast %cst_21 : f32 to vector<8x128xf32>
    %49 = arith.minimumf %45, %48 : vector<8x128xf32>
    %50 = math.exp %49 : vector<8x128xf32>
    %cst_22 = arith.constant 1.000000e+00 : f32
    %51 = vector.broadcast %cst_22 : f32 to vector<8x128xf32>
    %52 = arith.subf %50, %51 : vector<8x128xf32>
    %53 = arith.addf %47, %52 : vector<8x128xf32>
    %c1 = arith.constant 1 : index
    %c0_23 = arith.constant 0 : index
    %c0_24 = arith.constant 0 : index
    %54 = vector.load %arg7[%c1, %c0_23, %c0_24] : memref<2x1x128xf32, #tpu.memory_space<vmem>>, vector<1x1x128xf32>
    %55 = vector.shape_cast %54 : vector<1x1x128xf32> to vector<1x128xf32>
    %56 = vector.broadcast %55 : vector<1x128xf32> to vector<8x128xf32>
    %57 = arith.mulf %53, %56 : vector<8x128xf32>
    %cst_25 = arith.constant dense<0.000000e+00> : vector<8xf32>
    %58 = vector.multi_reduction <add>, %57, %cst_25 [1] : vector<8x128xf32> to vector<8xf32>
    %59 = vector.shape_cast %58 : vector<8xf32> to vector<8x1xf32>
    %60 = arith.addf %36, %59 : vector<8x1xf32>
    %61 = arith.mulf %57, %57 : vector<8x128xf32>
    %cst_26 = arith.constant dense<0.000000e+00> : vector<8xf32>
    %62 = vector.multi_reduction <add>, %61, %cst_26 [1] : vector<8x128xf32> to vector<8xf32>
    %63 = vector.shape_cast %62 : vector<8xf32> to vector<8x1xf32>
    %64 = arith.addf %40, %63 : vector<8x1xf32>
    %cst_27 = arith.constant 0.0151515156 : f32
    %65 = vector.broadcast %cst_27 : f32 to vector<8x1xf32>
    %66 = arith.mulf %60, %65 : vector<8x1xf32>
    %cst_28 = arith.constant 0.0151515156 : f32
    %67 = vector.broadcast %cst_28 : f32 to vector<8x1xf32>
    %68 = arith.mulf %64, %67 : vector<8x1xf32>
    %69 = arith.mulf %66, %66 : vector<8x1xf32>
    %70 = arith.subf %68, %69 : vector<8x1xf32>
    %c0_29 = arith.constant 0 : index
    %c0_30 = arith.constant 0 : index
    %71 = vector.load %arg3[%c0_29, %c0_30] : memref<8x1xf32, #tpu.memory_space<vmem>>, vector<8x1xf32>
    %cst_31 = arith.constant 9.99999974E-6 : f32
    %72 = vector.broadcast %cst_31 : f32 to vector<8x1xf32>
    %73 = arith.addf %70, %72 : vector<8x1xf32>
    %74 = math.rsqrt %73 : vector<8x1xf32>
    %75 = arith.mulf %71, %74 : vector<8x1xf32>
    %c0_32 = arith.constant 0 : index
    %c0_33 = arith.constant 0 : index
    %76 = vector.load %arg4[%c0_32, %c0_33] : memref<8x1xf32, #tpu.memory_space<vmem>>, vector<8x1xf32>
    %77 = arith.mulf %66, %75 : vector<8x1xf32>
    %78 = arith.subf %76, %77 : vector<8x1xf32>
    %79 = vector.broadcast %75 : vector<8x1xf32> to vector<8x128xf32>
    %80 = arith.mulf %29, %79 : vector<8x128xf32>
    %81 = vector.broadcast %78 : vector<8x1xf32> to vector<8x128xf32>
    %82 = arith.addf %80, %81 : vector<8x128xf32>
    %83 = vector.broadcast %31 : vector<1x128xf32> to vector<8x128xf32>
    %84 = arith.mulf %82, %83 : vector<8x128xf32>
    %85 = vector.broadcast %75 : vector<8x1xf32> to vector<8x128xf32>
    %86 = arith.mulf %53, %85 : vector<8x128xf32>
    %87 = vector.broadcast %78 : vector<8x1xf32> to vector<8x128xf32>
    %88 = arith.addf %86, %87 : vector<8x128xf32>
    %89 = vector.broadcast %55 : vector<1x128xf32> to vector<8x128xf32>
    %90 = arith.mulf %88, %89 : vector<8x128xf32>
    %c0_34 = arith.constant 0 : index
    %c0_35 = arith.constant 0 : index
    %91 = vector.load %arg5[%c0_34, %c0_35] : memref<16x8xf32, #tpu.memory_space<vmem>>, vector<16x8xf32>
    %c0_36 = arith.constant 0 : index
    %c0_37 = arith.constant 0 : index
    %92 = vector.load %arg6[%c0_36, %c0_37] : memref<8x1xf32, #tpu.memory_space<vmem>>, vector<8x1xf32>
    %cst_38 = arith.constant dense<0.000000e+00> : vector<16x128xf32>
    %93 = tpu.matmul %91, %84, %cst_38 {dimension_numbers = #tpu.dot_dimension_numbers<[1], [0], [0], [1], [0, 0, 1, 1], [], []>} : vector<16x8xf32>, vector<8x128xf32>, vector<16x128xf32> -> vector<16x128xf32>
    %cst_39 = arith.constant dense<0.000000e+00> : vector<16x128xf32>
    %94 = tpu.matmul %91, %90, %cst_39 {dimension_numbers = #tpu.dot_dimension_numbers<[1], [0], [0], [1], [0, 0, 1, 1], [], []>} : vector<16x8xf32>, vector<8x128xf32>, vector<16x128xf32> -> vector<16x128xf32>
    %cst_40 = arith.constant 0.000000e+00 : f32
    %95 = vector.broadcast %cst_40 : f32 to vector<8x128xf32>
    %96 = vector.extract_strided_slice %93 {offsets = [0, 0], sizes = [8, 128], strides = [1, 1]} : vector<16x128xf32> to vector<8x128xf32>
    %97 = arith.addf %95, %96 : vector<8x128xf32>
    %98 = vector.extract_strided_slice %94 {offsets = [8, 0], sizes = [8, 128], strides = [1, 1]} : vector<16x128xf32> to vector<8x128xf32>
    %cst_41 = arith.constant dense<0.000000e+00> : vector<8x128xf32>
    %99 = tpu.matmul %98, %7, %cst_41 {dimension_numbers = #tpu.dot_dimension_numbers<[1], [0], [0], [1], [0, 0, 1, 1], [], []>} : vector<8x128xf32>, vector<128x128xf32>, vector<8x128xf32> -> vector<8x128xf32>
    %100 = arith.addf %97, %99 : vector<8x128xf32>
    %101 = vector.broadcast %92 : vector<8x1xf32> to vector<8x128xf32>
    %102 = arith.addf %100, %101 : vector<8x128xf32>
    %c0_42 = arith.constant 0 : index
    %c0_43 = arith.constant 0 : index
    %c0_44 = arith.constant 0 : index
    %103 = vector.load %arg8[%c0_42, %c0_43, %c0_44] : memref<2x8x128xf32, #tpu.memory_space<vmem>>, vector<1x8x128xf32>
    %104 = vector.shape_cast %103 : vector<1x8x128xf32> to vector<8x128xf32>
    %105 = vector.shape_cast %102 : vector<8x128xf32> to vector<1x8x128xf32>
    tpu.vector_store %arg8[%c0_42, %c0_43, %c0_44], %105 {strides = array<i32>} : memref<2x8x128xf32, #tpu.memory_space<vmem>>, vector<1x8x128xf32>,
    %cst_45 = arith.constant 0.000000e+00 : f32
    %106 = vector.broadcast %cst_45 : f32 to vector<8x128xf32>
    %107 = vector.extract_strided_slice %94 {offsets = [0, 0], sizes = [8, 128], strides = [1, 1]} : vector<16x128xf32> to vector<8x128xf32>
    %108 = arith.addf %106, %107 : vector<8x128xf32>
    %109 = vector.extract_strided_slice %93 {offsets = [8, 0], sizes = [8, 128], strides = [1, 1]} : vector<16x128xf32> to vector<8x128xf32>
    %110 = arith.addf %108, %109 : vector<8x128xf32>
    %111 = vector.broadcast %92 : vector<8x1xf32> to vector<8x128xf32>
    %112 = arith.addf %110, %111 : vector<8x128xf32>
    %c1_46 = arith.constant 1 : index
    %c0_47 = arith.constant 0 : index
    %c0_48 = arith.constant 0 : index
    %113 = vector.load %arg8[%c1_46, %c0_47, %c0_48] : memref<2x8x128xf32, #tpu.memory_space<vmem>>, vector<1x8x128xf32>
    %114 = vector.shape_cast %113 : vector<1x8x128xf32> to vector<8x128xf32>
    %115 = vector.shape_cast %112 : vector<8x128xf32> to vector<1x8x128xf32>
    tpu.vector_store %arg8[%c1_46, %c0_47, %c0_48], %115 {strides = array<i32>} : memref<2x8x128xf32, #tpu.memory_space<vmem>>, vector<1x8x128xf32>,
    return
  }
}

</mosaic_0001>

<llo_original>
// kernel: stack_convtran_forward.1
$region0: #{stack_convtran_forward.1}
  #allocation0 [shape = 'u32[]', space=smem, size = 0x4, offset = 0x4, fixed_abs, tag = 'smem constant byte address 0x4 - core index']
  #allocation1 [shape = 'u32[144,128]{1,0:T(1,128)}', space=vmem, size = 0x12000, scoped, tag = 'internal scratch']
  %s0 = inlined_call_operand.vmem [shape: f32[8,128], index: 0, kind: input, shape index: {}]
  %s1 = inlined_call_operand.vmem [shape: f32[24,8], index: 1, kind: input, shape index: {}]
  %s2 = inlined_call_operand.vmem [shape: f32[8,1], index: 2, kind: input, shape index: {}]
  %s3 = inlined_call_operand.vmem [shape: f32[8,1], index: 3, kind: input, shape index: {}]
  %s4 = inlined_call_operand.vmem [shape: f32[8,1], index: 4, kind: input, shape index: {}]
  %s5 = inlined_call_operand.vmem [shape: f32[16,8], index: 5, kind: input, shape index: {}]
  %s6 = inlined_call_operand.vmem [shape: f32[8,1], index: 6, kind: input, shape index: {}]
  %s7 = inlined_call_operand.vmem [shape: f32[2,1,128], index: 7, kind: input, shape index: {}]
  %s8 = inlined_call_operand.vmem [shape: f32[2,8,128], index: 8, kind: output, shape index: {}]
  %s9 = sld [smem:[#allocation0]]
  $region42: #{stack_convtran_forward.1} parent=0
    _
  %s11 = ssub.s32 1, %s9
  %s12 = scalar_select 0, %s11, %s9
  // Predicated region
  $region2: #{stack_convtran_forward.1} parent=0 // pred_check
    _
  $region3: #{stack_convtran_forward.1} parent=0 // pred_check_branch
    %14 = sbr.rel (0) target = $region5
  $region4: #{stack_convtran_forward.1} parent=0 // pred_region
    _
  $region5: #{stack_convtran_forward.1} parent=0 // pred_fallthru
    _
  // Predicated region
  $region6: #{stack_convtran_forward.1} parent=0 // pred_check
    _
  $region7: #{stack_convtran_forward.1} parent=0 // pred_check_branch
    %16 = sbr.rel (0) target = $region9
  $region8: #{stack_convtran_forward.1} parent=0 // pred_region
    _
  $region9: #{stack_convtran_forward.1} parent=0 // pred_fallthru
    _
  // Predicated region
  $region10: #{stack_convtran_forward.1} parent=0 // pred_check
    _
  $region11: #{stack_convtran_forward.1} parent=0 // pred_check_branch
    %18 = sbr.rel (0) target = $region13
  $region12: #{stack_convtran_forward.1} parent=0 // pred_region
    _
  $region13: #{stack_convtran_forward.1} parent=0 // pred_fallthru
    _
  // Predicated region
  $region14: #{stack_convtran_forward.1} parent=0 // pred_check
    _
  $region15: #{stack_convtran_forward.1} parent=0 // pred_check_branch
    %20 = sbr.rel (0) target = $region17
  $region16: #{stack_convtran_forward.1} parent=0 // pred_region
    _
  $region17: #{stack_convtran_forward.1} parent=0 // pred_fallthru
    _
  // Predicated region
  $region18: #{stack_convtran_forward.1} parent=0 // pred_check
    _
  $region19: #{stack_convtran_forward.1} parent=0 // pred_check_branch
    %22 = sbr.rel (0) target = $region21
  $region20: #{stack_convtran_forward.1} parent=0 // pred_region
    _
  $region21: #{stack_convtran_forward.1} parent=0 // pred_fallthru
    _
  // Predicated region
  $region22: #{stack_convtran_forward.1} parent=0 // pred_check
    _
  $region23: #{stack_convtran_forward.1} parent=0 // pred_check_branch
    %24 = sbr.rel (0) target = $region25
  $region24: #{stack_convtran_forward.1} parent=0 // pred_region
    _
  $region25: #{stack_convtran_forward.1} parent=0 // pred_fallthru
    _
  // Predicated region
  $region26: #{stack_convtran_forward.1} parent=0 // pred_check
    _
  $region27: #{stack_convtran_forward.1} parent=0 // pred_check_branch
    %26 = sbr.rel (0) target = $region29
  $region28: #{stack_convtran_forward.1} parent=0 // pred_region
    _
  $region29: #{stack_convtran_forward.1} parent=0 // pred_fallthru
    _
  // Predicated region
  $region30: #{stack_convtran_forward.1} parent=0 // pred_check
    _
  $region31: #{stack_convtran_forward.1} parent=0 // pred_check_branch
    %28 = sbr.rel (0) target = $region33
  $region32: #{stack_convtran_forward.1} parent=0 // pred_region
    _
  $region33: #{stack_convtran_forward.1} parent=0 // pred_fallthru
    _
  %v29 = vlaneseq
  %v30 = vshrl.u32 %v29, 7
  %v31 = vadd.s32 %v30, 8
  %v32 = vadd.s32 %v30, 16
  %v33 = vadd.s32 %v30, 24
  %v34 = vadd.s32 %v30, 32
  %v35 = vadd.s32 %v30, 40
  %v36 = vadd.s32 %v30, 48
  %v37 = vadd.s32 %v30, 56
  %v38 = vadd.s32 %v30, 64
  %v39 = vadd.s32 %v30, 72
  %v40 = vadd.s32 %v30, 80
  %v41 = vadd.s32 %v30, 88
  %v42 = vadd.s32 %v30, 96
  %v43 = vadd.s32 %v30, 104
  %v44 = vadd.s32 %v30, 112
  %v45 = vadd.s32 %v30, 120
  %v46 = vlaneseq
  %v47 = vand.u32 %v46, 127
  %v48 = vsub.s32 %v47, %v30
  %v49 = vsub.s32 %v47, %v31
  %v50 = vsub.s32 %v47, %v32
  %v51 = vsub.s32 %v47, %v33
  %v52 = vsub.s32 %v47, %v34
  %v53 = vsub.s32 %v47, %v35
  %v54 = vsub.s32 %v47, %v36
  %v55 = vsub.s32 %v47, %v37
  %v56 = vsub.s32 %v47, %v38
  %v57 = vsub.s32 %v47, %v39
  %v58 = vsub.s32 %v47, %v40
  %v59 = vsub.s32 %v47, %v41
  %v60 = vsub.s32 %v47, %v42
  %v61 = vsub.s32 %v47, %v43
  %v62 = vsub.s32 %v47, %v44
  %v63 = vsub.s32 %v47, %v45
  %vm64 = vcmp.eq.s32.totalorder %v48, 1
  %vm65 = vcmp.eq.s32.totalorder %v49, 1
  %vm66 = vcmp.eq.s32.totalorder %v50, 1
  %vm67 = vcmp.eq.s32.totalorder %v51, 1
  %vm68 = vcmp.eq.s32.totalorder %v52, 1
  %vm69 = vcmp.eq.s32.totalorder %v53, 1
  %vm70 = vcmp.eq.s32.totalorder %v54, 1
  %vm71 = vcmp.eq.s32.totalorder %v55, 1
  %vm72 = vcmp.eq.s32.totalorder %v56, 1
  %vm73 = vcmp.eq.s32.totalorder %v57, 1
  %vm74 = vcmp.eq.s32.totalorder %v58, 1
  %vm75 = vcmp.eq.s32.totalorder %v59, 1
  %vm76 = vcmp.eq.s32.totalorder %v60, 1
  %vm77 = vcmp.eq.s32.totalorder %v61, 1
  %vm78 = vcmp.eq.s32.totalorder %v62, 1
  %vm79 = vcmp.eq.s32.totalorder %v63, 1
  %v80 = vsel %vm64, 1.0, 0.0
  %v81 = vsel %vm65, 1.0, 0.0
  %v82 = vsel %vm66, 1.0, 0.0
  %v83 = vsel %vm67, 1.0, 0.0
  %v84 = vsel %vm68, 1.0, 0.0
  %v85 = vsel %vm69, 1.0, 0.0
  %v86 = vsel %vm70, 1.0, 0.0
  %v87 = vsel %vm71, 1.0, 0.0
  %v88 = vsel %vm72, 1.0, 0.0
  %v89 = vsel %vm73, 1.0, 0.0
  %v90 = vsel %vm74, 1.0, 0.0
  %v91 = vsel %vm75, 1.0, 0.0
  %v92 = vsel %vm76, 1.0, 0.0
  %v93 = vsel %vm77, 1.0, 0.0
  %v94 = vsel %vm78, 1.0, 0.0
  %v95 = vsel %vm79, 1.0, 0.0
  %v96 = vld [vmem:[%s1] sm:$0xff]
  %v97 = vld [vmem:[%s1 + $0x8] sm:$0xff]
  %v98 = vld [vmem:[%s1 + $0x10] sm:$0xff]
  %v99 = vld [vmem:[%s0] sm:$0xff]
  %vm100 = vcmask 64512
  %v102 = vsel %vm100, %v96, 0
  %v105 = vsel %vm100, %v97, 0
  %v108 = vsel %vm100, %v98, 0
  %110 = vmatprep.subr.mxu0 0.0
  %111 = vmatpush1.msra.mxu0 %v99
  %112 = vmatprep.subr.mxu0 0.0
  %113 = vmatpush1.msra.mxu0 0.0
  %114 = vmatprep.subr.mxu0 0.0
  %115 = vmatpush1.msra.mxu0 0.0
  %116 = vmatprep.subr.mxu0 0.0
  %117 = vmatpush1.msra.mxu0 0.0
  %118 = vmatprep.subr.mxu0 0.0
  %119 = vmatpush1.msra.mxu0 0.0
  %120 = vmatprep.subr.mxu0 0.0
  %121 = vmatpush1.msra.mxu0 0.0
  %122 = vmatprep.subr.mxu0 0.0
  %123 = vmatpush1.msra.mxu0 0.0
  %124 = vmatprep.subr.mxu0 0.0
  %125 = vmatpush1.msra.mxu0 0.0
  %126 = vmatprep.subr.mxu0 0.0
  %127 = vmatpush1.msra.mxu0 0.0
  %128 = vmatprep.subr.mxu0 0.0
  %129 = vmatpush1.msra.mxu0 0.0
  %130 = vmatprep.subr.mxu0 0.0
  %131 = vmatpush1.msra.mxu0 0.0
  %132 = vmatprep.subr.mxu0 0.0
  %133 = vmatpush1.msra.mxu0 0.0
  %134 = vmatprep.subr.mxu0 0.0
  %135 = vmatpush1.msra.mxu0 0.0
  %136 = vmatprep.subr.mxu0 0.0
  %137 = vmatpush1.msra.mxu0 0.0
  %138 = vmatprep.subr.mxu0 0.0
  %139 = vmatpush1.msra.mxu0 0.0
  %140 = vmatprep.subr.mxu0 0.0
  %141 = vmatpush1.msra.mxu0 0.0
  %142 = vmatprep.subr.mxu0 0.0
  %143 = vmatpush1.msra.mxu0 0.0
  %144 = vmatprep.subr.mxu0 0.0
  %145 = vmatpush1.msra.mxu0 0.0
  %146 = vmatprep.subr.mxu0 0.0
  %147 = vmatpush1.msra.mxu0 0.0
  %148 = vmatprep.subr.mxu0 0.0
  %149 = vmatpush1.msra.mxu0 0.0
  %150 = vmatprep.subr.mxu0 0.0
  %151 = vmatpush1.msra.mxu0 0.0
  %152 = vmatprep.subr.mxu0 0.0
  %153 = vmatpush1.msra.mxu0 0.0
  %154 = vmatprep.subr.mxu0 0.0
  %155 = vmatpush1.msra.mxu0 0.0
  %156 = vmatprep.subr.mxu0 0.0
  %157 = vmatpush1.msra.mxu0 0.0
  %158 = vmatprep.subr.mxu0 0.0
  %159 = vmatpush1.msra.mxu0 0.0
  %160 = vmatprep.subr.mxu0 0.0
  %161 = vmatpush1.msra.mxu0 0.0
  %162 = vmatprep.subr.mxu0 0.0
  %163 = vmatpush1.msra.mxu0 0.0
  %164 = vmatprep.subr.mxu0 0.0
  %165 = vmatpush1.msra.mxu0 0.0
  %166 = vmatprep.subr.mxu0 0.0
  %167 = vmatpush1.msra.mxu0 0.0
  %168 = vmatprep.subr.mxu0 0.0
  %169 = vmatpush1.msra.mxu0 0.0
  %170 = vmatprep.subr.mxu0 0.0
  %171 = vmatpush1.msra.mxu0 0.0
  %172 = vmatprep.subr.mxu0 0.0
  %173 = vmatpush1.msra.mxu0 0.0
  %174 = vmatprep.mubr.f32.mxu0 0.0
  %175 = vmatmul.mubr.f32.gmra.mrb[0].mxu0 %v102
  %v176 = vpop.f32.mrb[0].mxu0
  %v177 = vadd.f32 0.0, %v176
  %v178 = vpop.f32.mrb[0].mxu0
  %179 = vmatprep.mubr.f32.mxu0 0.0
  %180 = vmatmul.mubr.f32.gmra.mrb[0].mxu0 %v105
  %v181 = vpop.f32.mrb[0].mxu0
  %v182 = vadd.f32 0.0, %v181
  %v183 = vpop.f32.mrb[0].mxu0
  %184 = vmatprep.mubr.f32.mxu0 0.0
  %185 = vmatmul.mubr.f32.gmra.mrb[0].mxu0 %v108
  %v186 = vpop.f32.mrb[0].mxu0
  %v187 = vadd.f32 0.0, %v186
  %v188 = vpop.f32.mrb[0].mxu0
  %189 = vdwg.mxu0
  %v190 = vld [vmem:[%s2] sm:$0xff]
  %v191 = vadd.f32 %v177, 0.0
  %192 = vmatprep.subr.mxu0 0.0
  %193 = vmatpush1.msra.mxu0 %v80
  %194 = vmatprep.subr.mxu0 0.0
  %195 = vmatpush1.msra.mxu0 %v81
  %196 = vmatprep.subr.mxu0 0.0
  %197 = vmatpush1.msra.mxu0 %v82
  %198 = vmatprep.subr.mxu0 0.0
  %199 = vmatpush1.msra.mxu0 %v83
  %200 = vmatprep.subr.mxu0 0.0
  %201 = vmatpush1.msra.mxu0 %v84
  %202 = vmatprep.subr.mxu0 0.0
  %203 = vmatpush1.msra.mxu0 %v85
  %204 = vmatprep.subr.mxu0 0.0
  %205 = vmatpush1.msra.mxu0 %v86
  %206 = vmatprep.subr.mxu0 0.0
  %207 = vmatpush1.msra.mxu0 %v87
  %208 = vmatprep.subr.mxu0 0.0
  %209 = vmatpush1.msra.mxu0 %v88
  %210 = vmatprep.subr.mxu0 0.0
  %211 = vmatpush1.msra.mxu0 %v89
  %212 = vmatprep.subr.mxu0 0.0
  %213 = vmatpush1.msra.mxu0 %v90
  %214 = vmatprep.subr.mxu0 0.0
  %215 = vmatpush1.msra.mxu0 %v91
  %216 = vmatprep.subr.mxu0 0.0
  %217 = vmatpush1.msra.mxu0 %v92
  %218 = vmatprep.subr.mxu0 0.0
  %219 = vmatpush1.msra.mxu0 %v93
  %220 = vmatprep.subr.mxu0 0.0
  %221 = vmatpush1.msra.mxu0 %v94
  %222 = vmatprep.subr.mxu0 0.0
  %223 = vmatpush1.msra.mxu0 %v95
  %224 = vmatprep.subr.mxu0 0.0
  %225 = vmatpush1.msra.mxu0 0.0
  %226 = vmatprep.subr.mxu0 0.0
  %227 = vmatpush1.msra.mxu0 0.0
  %228 = vmatprep.subr.mxu0 0.0
  %229 = vmatpush1.msra.mxu0 0.0
  %230 = vmatprep.subr.mxu0 0.0
  %231 = vmatpush1.msra.mxu0 0.0
  %232 = vmatprep.subr.mxu0 0.0
  %233 = vmatpush1.msra.mxu0 0.0
  %234 = vmatprep.subr.mxu0 0.0
  %235 = vmatpush1.msra.mxu0 0.0
  %236 = vmatprep.subr.mxu0 0.0
  %237 = vmatpush1.msra.mxu0 0.0
  %238 = vmatprep.subr.mxu0 0.0
  %239 = vmatpush1.msra.mxu0 0.0
  %240 = vmatprep.subr.mxu0 0.0
  %241 = vmatpush1.msra.mxu0 0.0
  %242 = vmatprep.subr.mxu0 0.0
  %243 = vmatpush1.msra.mxu0 0.0
  %244 = vmatprep.subr.mxu0 0.0
  %245 = vmatpush1.msra.mxu0 0.0
  %246 = vmatprep.subr.mxu0 0.0
  %247 = vmatpush1.msra.mxu0 0.0
  %248 = vmatprep.subr.mxu0 0.0
  %249 = vmatpush1.msra.mxu0 0.0
  %250 = vmatprep.subr.mxu0 0.0
  %251 = vmatpush1.msra.mxu0 0.0
  %252 = vmatprep.subr.mxu0 0.0
  %253 = vmatpush1.msra.mxu0 0.0
  %254 = vmatprep.subr.mxu0 0.0
  %255 = vmatpush1.msra.mxu0 0.0
  %256 = vmatprep.mubr.f32.mxu0 0.0
  %257 = vmatmul.mubr.f32.gmra.mrb[0].mxu0 %v187
  %v258 = vpop.f32.mrb[0].mxu0
  %v259 = vadd.f32 0.0, %v258
  %v260 = vpop.f32.mrb[0].mxu0
  %261 = vdwg.mxu0
  %v262 = vadd.f32 %v191, %v259
  %264 = vset.pattern.permute.xlu0 0
  %265 = vperm.xlu0 %264, %v190
  %v266 = vpop.permute.xlu0 %265
  %v268 = vadd.f32 %v262, %v266
  %v269 = vmax.f32 %v268, 0.0
  %v270 = vmin.f32 %v268, 0.0
  %v271 = vmul.f32 %v270, 1.442695
  %v272 = vpow.pop %v271
  %v273 = vsub.f32 %v272, 1.0
  %v274 = vadd.f32 %v269, %v273
  %v275 = vld [vmem:[%s7] sm:$0x1]
  %v277 = vlaneseq
  %v278 = vshrl.u32 %v277, 7
  %v279 = vsub.s32 0, %v278
  %v280 = vrot.slane %v275, %v279
  %v282 = vmul.f32 %v274, %v280
  %283 = vadd.xlane.f32.xlu0 %v282
  %v284 = vpop.xlane.xlu0 %283
  %v285 = vadd.f32 %v284, 0.0
  %v286 = vmul.f32 %v282, %v282
  %287 = vadd.xlane.f32.xlu0 %v286
  %v288 = vpop.xlane.xlu0 %287
  %v289 = vadd.f32 %v288, 0.0
  %v290 = vadd.f32 %v182, 0.0
  %v291 = vadd.f32 %v290, %v266
  %v292 = vmax.f32 %v291, 0.0
  %v293 = vmin.f32 %v291, 0.0
  %v294 = vmul.f32 %v293, 1.442695
  %v295 = vpow.pop %v294
  %v296 = vsub.f32 %v295, 1.0
  %v297 = vadd.f32 %v292, %v296
  %s298 = scalar_lea.vmem %s7, 1
  %v299 = vld [vmem:[%s298] sm:$0x1]
  %v301 = vlaneseq
  %v302 = vshrl.u32 %v301, 7
  %v303 = vsub.s32 0, %v302
  %v304 = vrot.slane %v299, %v303
  %v306 = vmul.f32 %v297, %v304
  %307 = vadd.xlane.f32.xlu0 %v306
  %v308 = vpop.xlane.xlu0 %307
  %v309 = vadd.f32 %v285, %v308
  %v310 = vmul.f32 %v306, %v306
  %311 = vadd.xlane.f32.xlu0 %v310
  %v312 = vpop.xlane.xlu0 %311
  %v313 = vadd.f32 %v289, %v312
  %v314 = vmul.f32 %v309, 0.015151516
  %v315 = vmul.f32 %v313, 0.015151516
  %v316 = vmul.f32 %v314, %v314
  %v317 = vsub.f32 %v315, %v316
  %v318 = vld [vmem:[%s3] sm:$0xff]
  %v319 = vadd.f32 %v317, 1e-05
  %v320 = vrsqrt.pop %v319
  %v321 = vmul.f32 %v318, %v320
  %v322 = vld [vmem:[%s4] sm:$0xff]
  %v323 = vmul.f32 %v314, %v321
  %v324 = vsub.f32 %v322, %v323
  %326 = vset.pattern.permute.xlu0 0
  %327 = vperm.xlu0 %326, %v321
  %v328 = vpop.permute.xlu0 %327
  %v330 = vmul.f32 %v274, %v328
  %332 = vset.pattern.permute.xlu0 0
  %333 = vperm.xlu0 %332, %v324
  %v334 = vpop.permute.xlu0 %333
  %v336 = vadd.f32 %v330, %v334
  %v337 = vmul.f32 %v336, %v280
  %v338 = vmul.f32 %v297, %v328
  %v339 = vadd.f32 %v338, %v334
  %v340 = vmul.f32 %v339, %v304
  %v341 = vld [vmem:[%s5] sm:$0xff]
  %v342 = vld [vmem:[%s5 + $0x8] sm:$0xff]
  %v343 = vld [vmem:[%s6] sm:$0xff]
  %v345 = vsel %vm100, %v341, 0
  %v348 = vsel %vm100, %v342, 0
  %350 = vmatprep.subr.mxu0 0.0
  %351 = vmatpush1.msra.mxu0 %v337
  %352 = vmatprep.subr.mxu0 0.0
  %353 = vmatpush1.msra.mxu0 0.0
  %354 = vmatprep.subr.mxu0 0.0
  %355 = vmatpush1.msra.mxu0 0.0
  %356 = vmatprep.subr.mxu0 0.0
  %357 = vmatpush1.msra.mxu0 0.0
  %358 = vmatprep.subr.mxu0 0.0
  %359 = vmatpush1.msra.mxu0 0.0
  %360 = vmatprep.subr.mxu0 0.0
  %361 = vmatpush1.msra.mxu0 0.0
  %362 = vmatprep.subr.mxu0 0.0
  %363 = vmatpush1.msra.mxu0 0.0
  %364 = vmatprep.subr.mxu0 0.0
  %365 = vmatpush1.msra.mxu0 0.0
  %366 = vmatprep.subr.mxu0 0.0
  %367 = vmatpush1.msra.mxu0 0.0
  %368 = vmatprep.subr.mxu0 0.0
  %369 = vmatpush1.msra.mxu0 0.0
  %370 = vmatprep.subr.mxu0 0.0
  %371 = vmatpush1.msra.mxu0 0.0
  %372 = vmatprep.subr.mxu0 0.0
  %373 = vmatpush1.msra.mxu0 0.0
  %374 = vmatprep.subr.mxu0 0.0
  %375 = vmatpush1.msra.mxu0 0.0
  %376 = vmatprep.subr.mxu0 0.0
  %377 = vmatpush1.msra.mxu0 0.0
  %378 = vmatprep.subr.mxu0 0.0
  %379 = vmatpush1.msra.mxu0 0.0
  %380 = vmatprep.subr.mxu0 0.0
  %381 = vmatpush1.msra.mxu0 0.0
  %382 = vmatprep.subr.mxu0 0.0
  %383 = vmatpush1.msra.mxu0 0.0
  %384 = vmatprep.subr.mxu0 0.0
  %385 = vmatpush1.msra.mxu0 0.0
  %386 = vmatprep.subr.mxu0 0.0
  %387 = vmatpush1.msra.mxu0 0.0
  %388 = vmatprep.subr.mxu0 0.0
  %389 = vmatpush1.msra.mxu0 0.0
  %390 = vmatprep.subr.mxu0 0.0
  %391 = vmatpush1.msra.mxu0 0.0
  %392 = vmatprep.subr.mxu0 0.0
  %393 = vmatpush1.msra.mxu0 0.0
  %394 = vmatprep.subr.mxu0 0.0
  %395 = vmatpush1.msra.mxu0 0.0
  %396 = vmatprep.subr.mxu0 0.0
  %397 = vmatpush1.msra.mxu0 0.0
  %398 = vmatprep.subr.mxu0 0.0
  %399 = vmatpush1.msra.mxu0 0.0
  %400 = vmatprep.subr.mxu0 0.0
  %401 = vmatpush1.msra.mxu0 0.0
  %402 = vmatprep.subr.mxu0 0.0
  %403 = vmatpush1.msra.mxu0 0.0
  %404 = vmatprep.subr.mxu0 0.0
  %405 = vmatpush1.msra.mxu0 0.0
  %406 = vmatprep.subr.mxu0 0.0
  %407 = vmatpush1.msra.mxu0 0.0
  %408 = vmatprep.subr.mxu0 0.0
  %409 = vmatpush1.msra.mxu0 0.0
  %410 = vmatprep.subr.mxu0 0.0
  %411 = vmatpush1.msra.mxu0 0.0
  %412 = vmatprep.subr.mxu0 0.0
  %413 = vmatpush1.msra.mxu0 0.0
  %414 = vmatprep.mubr.f32.mxu0 0.0
  %415 = vmatmul.mubr.f32.gmra.mrb[0].mxu0 %v345
  %v416 = vpop.f32.mrb[0].mxu0
  %v417 = vadd.f32 0.0, %v416
  %v418 = vpop.f32.mrb[0].mxu0
  %419 = vmatprep.mubr.f32.mxu0 0.0
  %420 = vmatmul.mubr.f32.gmra.mrb[0].mxu0 %v348
  %v421 = vpop.f32.mrb[0].mxu0
  %v422 = vadd.f32 0.0, %v421
  %v423 = vpop.f32.mrb[0].mxu0
  %424 = vdwg.mxu0
  %425 = vmatprep.subr.mxu0 0.0
  %426 = vmatpush1.msra.mxu0 %v340
  %427 = vmatprep.subr.mxu0 0.0
  %428 = vmatpush1.msra.mxu0 0.0
  %429 = vmatprep.subr.mxu0 0.0
  %430 = vmatpush1.msra.mxu0 0.0
  %431 = vmatprep.subr.mxu0 0.0
  %432 = vmatpush1.msra.mxu0 0.0
  %433 = vmatprep.subr.mxu0 0.0
  %434 = vmatpush1.msra.mxu0 0.0
  %435 = vmatprep.subr.mxu0 0.0
  %436 = vmatpush1.msra.mxu0 0.0
  %437 = vmatprep.subr.mxu0 0.0
  %438 = vmatpush1.msra.mxu0 0.0
  %439 = vmatprep.subr.mxu0 0.0
  %440 = vmatpush1.msra.mxu0 0.0
  %441 = vmatprep.subr.mxu0 0.0
  %442 = vmatpush1.msra.mxu0 0.0
  %443 = vmatprep.subr.mxu0 0.0
  %444 = vmatpush1.msra.mxu0 0.0
  %445 = vmatprep.subr.mxu0 0.0
  %446 = vmatpush1.msra.mxu0 0.0
  %447 = vmatprep.subr.mxu0 0.0
  %448 = vmatpush1.msra.mxu0 0.0
  %449 = vmatprep.subr.mxu0 0.0
  %450 = vmatpush1.msra.mxu0 0.0
  %451 = vmatprep.subr.mxu0 0.0
  %452 = vmatpush1.msra.mxu0 0.0
  %453 = vmatprep.subr.mxu0 0.0
  %454 = vmatpush1.msra.mxu0 0.0
  %455 = vmatprep.subr.mxu0 0.0
  %456 = vmatpush1.msra.mxu0 0.0
  %457 = vmatprep.subr.mxu0 0.0
  %458 = vmatpush1.msra.mxu0 0.0
  %459 = vmatprep.subr.mxu0 0.0
  %460 = vmatpush1.msra.mxu0 0.0
  %461 = vmatprep.subr.mxu0 0.0
  %462 = vmatpush1.msra.mxu0 0.0
  %463 = vmatprep.subr.mxu0 0.0
  %464 = vmatpush1.msra.mxu0 0.0
  %465 = vmatprep.subr.mxu0 0.0
  %466 = vmatpush1.msra.mxu0 0.0
  %467 = vmatprep.subr.mxu0 0.0
  %468 = vmatpush1.msra.mxu0 0.0
  %469 = vmatprep.subr.mxu0 0.0
  %470 = vmatpush1.msra.mxu0 0.0
  %471 = vmatprep.subr.mxu0 0.0
  %472 = vmatpush1.msra.mxu0 0.0
  %473 = vmatprep.subr.mxu0 0.0
  %474 = vmatpush1.msra.mxu0 0.0
  %475 = vmatprep.subr.mxu0 0.0
  %476 = vmatpush1.msra.mxu0 0.0
  %477 = vmatprep.subr.mxu0 0.0
  %478 = vmatpush1.msra.mxu0 0.0
  %479 = vmatprep.subr.mxu0 0.0
  %480 = vmatpush1.msra.mxu0 0.0
  %481 = vmatprep.subr.mxu0 0.0
  %482 = vmatpush1.msra.mxu0 0.0
  %483 = vmatprep.subr.mxu0 0.0
  %484 = vmatpush1.msra.mxu0 0.0
  %485 = vmatprep.subr.mxu0 0.0
  %486 = vmatpush1.msra.mxu0 0.0
  %487 = vmatprep.subr.mxu0 0.0
  %488 = vmatpush1.msra.mxu0 0.0
  %489 = vmatprep.mubr.f32.mxu0 0.0
  %490 = vmatmul.mubr.f32.gmra.mrb[0].mxu0 %v345
  %v491 = vpop.f32.mrb[0].mxu0
  %v492 = vadd.f32 0.0, %v491
  %v493 = vpop.f32.mrb[0].mxu0
  %494 = vmatprep.mubr.f32.mxu0 0.0
  %495 = vmatmul.mubr.f32.gmra.mrb[0].mxu0 %v348
  %v496 = vpop.f32.mrb[0].mxu0
  %v497 = vadd.f32 0.0, %v496
  %v498 = vpop.f32.mrb[0].mxu0
  %499 = vdwg.mxu0
  %v500 = vadd.f32 %v417, 0.0
  %501 = vmatprep.subr.mxu0 0.0
  %502 = vmatpush1.msra.mxu0 %v80
  %503 = vmatprep.subr.mxu0 0.0
  %504 = vmatpush1.msra.mxu0 %v81
  %505 = vmatprep.subr.mxu0 0.0
  %506 = vmatpush1.msra.mxu0 %v82
  %507 = vmatprep.subr.mxu0 0.0
  %508 = vmatpush1.msra.mxu0 %v83
  %509 = vmatprep.subr.mxu0 0.0
  %510 = vmatpush1.msra.mxu0 %v84
  %511 = vmatprep.subr.mxu0 0.0
  %512 = vmatpush1.msra.mxu0 %v85
  %513 = vmatprep.subr.mxu0 0.0
  %514 = vmatpush1.msra.mxu0 %v86
  %515 = vmatprep.subr.mxu0 0.0
  %516 = vmatpush1.msra.mxu0 %v87
  %517 = vmatprep.subr.mxu0 0.0
  %518 = vmatpush1.msra.mxu0 %v88
  %519 = vmatprep.subr.mxu0 0.0
  %520 = vmatpush1.msra.mxu0 %v89
  %521 = vmatprep.subr.mxu0 0.0
  %522 = vmatpush1.msra.mxu0 %v90
  %523 = vmatprep.subr.mxu0 0.0
  %524 = vmatpush1.msra.mxu0 %v91
  %525 = vmatprep.subr.mxu0 0.0
  %526 = vmatpush1.msra.mxu0 %v92
  %527 = vmatprep.subr.mxu0 0.0
  %528 = vmatpush1.msra.mxu0 %v93
  %529 = vmatprep.subr.mxu0 0.0
  %530 = vmatpush1.msra.mxu0 %v94
  %531 = vmatprep.subr.mxu0 0.0
  %532 = vmatpush1.msra.mxu0 %v95
  %533 = vmatprep.subr.mxu0 0.0
  %534 = vmatpush1.msra.mxu0 0.0
  %535 = vmatprep.subr.mxu0 0.0
  %536 = vmatpush1.msra.mxu0 0.0
  %537 = vmatprep.subr.mxu0 0.0
  %538 = vmatpush1.msra.mxu0 0.0
  %539 = vmatprep.subr.mxu0 0.0
  %540 = vmatpush1.msra.mxu0 0.0
  %541 = vmatprep.subr.mxu0 0.0
  %542 = vmatpush1.msra.mxu0 0.0
  %543 = vmatprep.subr.mxu0 0.0
  %544 = vmatpush1.msra.mxu0 0.0
  %545 = vmatprep.subr.mxu0 0.0
  %546 = vmatpush1.msra.mxu0 0.0
  %547 = vmatprep.subr.mxu0 0.0
  %548 = vmatpush1.msra.mxu0 0.0
  %549 = vmatprep.subr.mxu0 0.0
  %550 = vmatpush1.msra.mxu0 0.0
  %551 = vmatprep.subr.mxu0 0.0
  %552 = vmatpush1.msra.mxu0 0.0
  %553 = vmatprep.subr.mxu0 0.0
  %554 = vmatpush1.msra.mxu0 0.0
  %555 = vmatprep.subr.mxu0 0.0
  %556 = vmatpush1.msra.mxu0 0.0
  %557 = vmatprep.subr.mxu0 0.0
  %558 = vmatpush1.msra.mxu0 0.0
  %559 = vmatprep.subr.mxu0 0.0
  %560 = vmatpush1.msra.mxu0 0.0
  %561 = vmatprep.subr.mxu0 0.0
  %562 = vmatpush1.msra.mxu0 0.0
  %563 = vmatprep.subr.mxu0 0.0
  %564 = vmatpush1.msra.mxu0 0.0
  %565 = vmatprep.mubr.f32.mxu0 0.0
  %566 = vmatmul.mubr.f32.gmra.mrb[0].mxu0 %v497
  %v567 = vpop.f32.mrb[0].mxu0
  %v568 = vadd.f32 0.0, %v567
  %v569 = vpop.f32.mrb[0].mxu0
  %570 = vdwg.mxu0
  %v571 = vadd.f32 %v500, %v568
  %573 = vset.pattern.permute.xlu0 0
  %574 = vperm.xlu0 %573, %v343
  %v575 = vpop.permute.xlu0 %574
  %v577 = vadd.f32 %v571, %v575
  %578 = vst [vmem:[%s8] sm:$0xff] %v577
  %v579 = vadd.f32 %v492, 0.0
  %v580 = vadd.f32 %v579, %v422
  %v581 = vadd.f32 %v580, %v575
  %s582 = scalar_lea.vmem %s8, 8
  %583 = vst [vmem:[%s582] sm:$0xff] %v581
  // Predicated region
  $region34: #{stack_convtran_forward.1} parent=0 // pred_check
    _
  $region35: #{stack_convtran_forward.1} parent=0 // pred_check_branch
    %585 = sbr.rel (0) target = $region37
  $region36: #{stack_convtran_forward.1} parent=0 // pred_region
    _
  $region37: #{stack_convtran_forward.1} parent=0 // pred_fallthru
    _
  // Predicated region
  $region38: #{stack_convtran_forward.1} parent=0 // pred_check
    _
  $region39: #{stack_convtran_forward.1} parent=0 // pred_check_branch
    %587 = sbr.rel (0) target = $region41
  $region40: #{stack_convtran_forward.1} parent=0 // pred_region
    _
  $region41: #{stack_convtran_forward.1} parent=0 // pred_fallthru
    _

</llo_original>
